<compile_context>
chip_gen: v7x
topology: tpu7x:2x2x1
jax: 0.10.0
libtpu: 0.0.40
codegen_flags: <defaults>
</compile_context>

<pallas_src>
import functools

import jax
import jax.numpy as jnp
from jax.experimental import pallas as pl
from jax.experimental.pallas import tpu as pltpu

# ----------------------------- config ---------------------------------------
N, CI, H, W = 2, 4, 16, 16          # input (NCHW)
CO, K = 8, 3                        # ConvTranspose2d(out_channels=8, kernel_size=3)
STRIDE, PAD, OUTPAD = 1, 0, 0       # module defaults
HO = (H - 1) * STRIDE - 2 * PAD + K + OUTPAD   # 18
WO = (W - 1) * STRIDE - 2 * PAD + K + OUTPAD   # 18
BN_EPS = 1e-5
ACTIVATION = None                   # module default


# ----------------------------- Pallas kernel --------------------------------
def upconv_bn_kernel(flat_ref, w_ref, gb_ref, mask_ref, o_ref, patch_ref, *,
                     n, ci, h, w, co, k, lp, activation):
    """flat_ref:  (N, Ci, Lf)      zero-padded, row-major-flattened input planes
                                    (padding done in the wrapper; Lf >= off_max+Lp)
       w_ref:     (Co, KKCi_pad)   flipped ConvTranspose weights, zero-padded rows
       gb_ref:    (2, Co, 1)       packed (gamma, beta)
       mask_ref:  (1, N*Lp)        {0,1} validity mask for the canvas columns
       o_ref:     (Co, N*Lp)       output canvas, batch concatenated on lanes
       patch_ref: (KKCi_pad, N*Lp) VMEM scratch: im2col patches
    """
    wp = w + 2 * (k - 1)
    ho, wo = h + k - 1, w + k - 1
    n_taps = k * k
    n_pairs = (n_taps + 1) // 2

    # ---- implicit im2col: 8-sublane / 128-lane aligned paired-tap stores -----
    for i in range(n):
        fl = flat_ref[i]                                     # (Ci, Lf)
        for pr in range(n_pairs):
            t0 = 2 * pr
            t1 = t0 + 1
            off0 = (t0 // k) * wp + (t0 % k)
            s0 = fl[:, off0:off0 + lp]                       # (Ci, Lp)
            if t1 < n_taps:
                off1 = (t1 // k) * wp + (t1 % k)
                s1 = fl[:, off1:off1 + lp]
            else:
                # Filler rows for the padded tap: the matching wm columns are
                # zero, so the values are irrelevant -- reuse s0 (cheapest).
                s1 = s0
            patch_ref[pr * 2 * ci:(pr + 1) * 2 * ci, i * lp:(i + 1) * lp] = (
                jnp.concatenate([s0, s1], axis=0))           # (2*Ci, Lp) aligned store

    # ---- ConvTranspose2d: ONE MXU matmul over all batch elements -------------
    acc = jnp.dot(w_ref[...], patch_ref[...],
                  preferred_element_type=jnp.float32)        # (Co, N*Lp) f32

    # Conv bias intentionally omitted: exactly cancelled by the training-mode
    # BatchNorm mean subtraction below.

    # ---- BatchNorm2d (training-mode batch stats, biased var), one masked pass
    maskf = mask_ref[...]                                    # (1, N*Lp)
    inv_cnt = 1.0 / (n * ho * wo)
    am = acc * maskf
    s1v = jnp.sum(am, axis=1, keepdims=True)                 # (Co, 1)
    s2v = jnp.sum(am * acc, axis=1, keepdims=True)           # masked sum of squares
    mean = s1v * inv_cnt
    var = s2v * inv_cnt - mean * mean
    gb = gb_ref[...]                                         # (2, Co, 1)
    scale = gb[0] * jax.lax.rsqrt(var + BN_EPS)              # (Co, 1)
    shift = gb[1] - mean * scale                             # (Co, 1)
    y = acc * scale + shift                                  # single fused FMA pass

    if activation == "relu":
        y = jnp.maximum(y, 0.0)
    elif activation == "leaky_relu":
        y = jnp.where(y >= 0, y, 0.01 * y)
    elif activation == "tanh":
        y = jnp.tanh(y)
    elif activation == "silu":
        y = y * jax.nn.sigmoid(y)
    # activation=None -> Identity

    o_ref[...] = y                                           # dense (8, 768) store


# ----------------------------- wrapper ---------------------------------------
@functools.partial(jax.jit, static_argnames=("activation",))
def upconv_block_2d(x_nchw, weight, bias, gamma, beta, activation=None):
    """x_nchw: (N, Ci, H, W); weight: (Ci, Co, K, K) (PyTorch ConvTranspose2d layout).

    `bias` is accepted for API parity but unused: a per-channel constant added
    before training-mode BatchNorm is exactly cancelled by the mean subtraction.
    (NOT valid for eval-mode/running-stats BN.)
    """
    del bias
    n, ci, h, w = x_nchw.shape
    k = weight.shape[-1]
    co = weight.shape[1]
    ho, wo = h + k - 1, w + k - 1
    hp, wp = h + 2 * (k - 1), w + 2 * (k - 1)
    l = ho * wp                               # 360 valid canvas columns per batch
    lp = pl.cdiv(l, 128) * 128                # 384: whole-vreg, lane-aligned canvas
    off_max = (k - 1) * wp + (k - 1)          # 42
    lf = off_max + lp                         # flat plane length so slices stay in-bounds

    # ---- zero padding + flatten done OUTSIDE the kernel (one fused XLA pad) ---
    xp = jnp.pad(x_nchw.astype(jnp.float32),
                 ((0, 0), (0, 0), (k - 1, k - 1), (k - 1, k - 1)))   # (N,Ci,Hp,Wp)
    flat = xp.reshape(n, ci, hp * wp)
    flat = jnp.pad(flat, ((0, 0), (0, 0), (0, lf - hp * wp)))        # (N,Ci,Lf)

    # Flipped-kernel matmul matrix: wm[co, (p*K+q)*Ci + ci] = W[ci, co, K-1-p, K-1-q],
    # zero-padded from K*K*Ci=36 to a sublane-aligned 40 rows.
    n_taps = k * k
    n_pairs = (n_taps + 1) // 2
    kkci_pad = n_pairs * 2 * ci
    wm = (jnp.flip(weight, axis=(2, 3))
             .transpose(1, 2, 3, 0)
             .reshape(co, n_taps * ci)
             .astype(jnp.float32))
    wm = jnp.pad(wm, ((0, 0), (0, kkci_pad - n_taps * ci)))          # (Co, 40)

    gb = jnp.stack([gamma, beta]).reshape(2, co, 1).astype(jnp.float32)

    # {0,1} validity mask for the canvas columns (constant-folded by XLA).
    pos = jnp.arange(n * lp) % lp
    maskf = ((pos < l) & ((pos % wp) < wo)).astype(jnp.float32).reshape(1, n * lp)

    kernel = functools.partial(upconv_bn_kernel, n=n, ci=ci, h=h, w=w, co=co, k=k,
                               lp=lp, activation=activation)
    vmem = pl.BlockSpec(memory_space=pltpu.MemorySpace.VMEM)
    flops = 2 * co * kkci_pad * n * lp + 8 * co * n * lp
    bytes_accessed = 4 * (flat.size + wm.size + gb.size + maskf.size + co * n * lp)

    canvas = pl.pallas_call(
        kernel,
        out_shape=jax.ShapeDtypeStruct((co, n * lp), jnp.float32),
        in_specs=[vmem, vmem, vmem, vmem],
        out_specs=vmem,
        scratch_shapes=[pltpu.VMEM((kkci_pad, n * lp), jnp.float32)],  # im2col patches
        cost_estimate=pl.CostEstimate(flops=flops, transcendentals=co,
                                      bytes_accessed=bytes_accessed),
    )(flat, wm, gb, maskf)

    # (Co, N*Lp) -> drop lane padding -> (Co, N, Ho, Wp) -> drop junk cols -> NCHW.
    out = canvas.reshape(co, n, lp)[:, :, :l].reshape(co, n, ho, wp)[:, :, :, :wo]
    return jnp.transpose(out, (1, 0, 2, 3))


# ----------------------------- reference (pure JAX) --------------------------
def reference(x_nchw, weight, bias, gamma, beta):
    k = weight.shape[-1]
    # transposed conv == conv with flipped kernel and full padding
    w_conv = jnp.transpose(jnp.flip(weight, axis=(2, 3)), (1, 0, 2, 3))  # (Co,Ci,K,K)
    y = jax.lax.conv_general_dilated(
        x_nchw, w_conv, window_strides=(1, 1),
        padding=[(k - 1, k - 1), (k - 1, k - 1)],
        dimension_numbers=("NCHW", "OIHW", "NCHW"))
    y = y + bias[None, :, None, None]
    mean = y.mean(axis=(0, 2, 3), keepdims=True)
    var = ((y - mean) ** 2).mean(axis=(0, 2, 3), keepdims=True)
    y = (y - mean) * jax.lax.rsqrt(var + BN_EPS)
    return y * gamma[None, :, None, None] + beta[None, :, None, None]


# ----------------------------- main ------------------------------------------
if __name__ == "__main__":
    key = jax.random.PRNGKey(0)
    kx, kw, kb, kg, kbt = jax.random.split(key, 5)

    x = jax.random.normal(kx, (N, CI, H, W), jnp.float32)
    # ConvTranspose2d weight shape: (in_channels, out_channels, K, K)
    weight = jax.random.normal(kw, (CI, CO, K, K), jnp.float32) * 0.1
    bias = jax.random.normal(kb, (CO,), jnp.float32) * 0.1
    gamma = 1.0 + 0.1 * jax.random.normal(kg, (CO,), jnp.float32)
    beta = 0.1 * jax.random.normal(kbt, (CO,), jnp.float32)

    out = upconv_block_2d(x, weight, bias, gamma, beta, activation=ACTIVATION)
    out = jax.block_until_ready(out)

    ref = reference(x, weight, bias, gamma, beta)
    assert out.shape == (N, CO, HO, WO), out.shape
    err = float(jnp.abs(out - ref).max())
    assert err < 5e-4, err

    # TODO(synk): nn.Dropout2d path (dropout>0) not implemented; module default
    # dropout=0 means the layer is never created.

    print("KERNEL_OK")
</pallas_src>

<mosaic_0001>
module attributes {stable_mosaic.version = 11 : i64} {
  func.func @upconv_bn_kernel(%arg0: memref<2x4x426xf32, #tpu.memory_space<vmem>>, %arg1: memref<8x40xf32, #tpu.memory_space<vmem>>, %arg2: memref<2x8x1xf32, #tpu.memory_space<vmem>>, %arg3: memref<1x768xf32, #tpu.memory_space<vmem>>, %arg4: memref<8x768xf32, #tpu.memory_space<vmem>>, %arg5: memref<40x768xf32, #tpu.memory_space<vmem>>) attributes {dimension_semantics = [], scalar_prefetch = 0 : i64, scratch_operands = 1 : i64, tpu.core_type = #tpu.core_type<tc>} {
    %c0 = arith.constant 0 : index
    %c0_0 = arith.constant 0 : index
    %c0_1 = arith.constant 0 : index
    %0 = vector.load %arg0[%c0, %c0_0, %c0_1] : memref<2x4x426xf32, #tpu.memory_space<vmem>>, vector<1x4x426xf32>
    %1 = vector.shape_cast %0 : vector<1x4x426xf32> to vector<4x426xf32>
    %2 = vector.extract_strided_slice %1 {offsets = [0, 0], sizes = [4, 384], strides = [1, 1]} : vector<4x426xf32> to vector<4x384xf32>
    %3 = vector.extract_strided_slice %1 {offsets = [0, 1], sizes = [4, 384], strides = [1, 1]} : vector<4x426xf32> to vector<4x384xf32>
    %4 = tpu.concatenate %2, %3 in 0 : vector<4x384xf32>, vector<4x384xf32> -> vector<8x384xf32>
    %c0_2 = arith.constant 0 : index
    %c0_3 = arith.constant 0 : index
    %5 = vector.load %arg5[%c0_2, %c0_3] : memref<40x768xf32, #tpu.memory_space<vmem>>, vector<8x384xf32>
    tpu.vector_store %arg5[%c0_2, %c0_3], %4 {strides = array<i32>} : memref<40x768xf32, #tpu.memory_space<vmem>>, vector<8x384xf32>,
    %6 = vector.extract_strided_slice %1 {offsets = [0, 2], sizes = [4, 384], strides = [1, 1]} : vector<4x426xf32> to vector<4x384xf32>
    %7 = vector.extract_strided_slice %1 {offsets = [0, 20], sizes = [4, 384], strides = [1, 1]} : vector<4x426xf32> to vector<4x384xf32>
    %8 = tpu.concatenate %6, %7 in 0 : vector<4x384xf32>, vector<4x384xf32> -> vector<8x384xf32>
    %c8 = arith.constant 8 : index
    %c0_4 = arith.constant 0 : index
    %9 = vector.load %arg5[%c8, %c0_4] : memref<40x768xf32, #tpu.memory_space<vmem>>, vector<8x384xf32>
    tpu.vector_store %arg5[%c8, %c0_4], %8 {strides = array<i32>} : memref<40x768xf32, #tpu.memory_space<vmem>>, vector<8x384xf32>,
    %10 = vector.extract_strided_slice %1 {offsets = [0, 21], sizes = [4, 384], strides = [1, 1]} : vector<4x426xf32> to vector<4x384xf32>
    %11 = vector.extract_strided_slice %1 {offsets = [0, 22], sizes = [4, 384], strides = [1, 1]} : vector<4x426xf32> to vector<4x384xf32>
    %12 = tpu.concatenate %10, %11 in 0 : vector<4x384xf32>, vector<4x384xf32> -> vector<8x384xf32>
    %c16 = arith.constant 16 : index
    %c0_5 = arith.constant 0 : index
    %13 = vector.load %arg5[%c16, %c0_5] : memref<40x768xf32, #tpu.memory_space<vmem>>, vector<8x384xf32>
    tpu.vector_store %arg5[%c16, %c0_5], %12 {strides = array<i32>} : memref<40x768xf32, #tpu.memory_space<vmem>>, vector<8x384xf32>,
    %14 = vector.extract_strided_slice %1 {offsets = [0, 40], sizes = [4, 384], strides = [1, 1]} : vector<4x426xf32> to vector<4x384xf32>
    %15 = vector.extract_strided_slice %1 {offsets = [0, 41], sizes = [4, 384], strides = [1, 1]} : vector<4x426xf32> to vector<4x384xf32>
    %16 = tpu.concatenate %14, %15 in 0 : vector<4x384xf32>, vector<4x384xf32> -> vector<8x384xf32>
    %c24 = arith.constant 24 : index
    %c0_6 = arith.constant 0 : index
    %17 = vector.load %arg5[%c24, %c0_6] : memref<40x768xf32, #tpu.memory_space<vmem>>, vector<8x384xf32>
    tpu.vector_store %arg5[%c24, %c0_6], %16 {strides = array<i32>} : memref<40x768xf32, #tpu.memory_space<vmem>>, vector<8x384xf32>,
    %18 = vector.extract_strided_slice %1 {offsets = [0, 42], sizes = [4, 384], strides = [1, 1]} : vector<4x426xf32> to vector<4x384xf32>
    %19 = tpu.concatenate %18, %18 in 0 : vector<4x384xf32>, vector<4x384xf32> -> vector<8x384xf32>
    %c32 = arith.constant 32 : index
    %c0_7 = arith.constant 0 : index
    %20 = vector.load %arg5[%c32, %c0_7] : memref<40x768xf32, #tpu.memory_space<vmem>>, vector<8x384xf32>
    tpu.vector_store %arg5[%c32, %c0_7], %19 {strides = array<i32>} : memref<40x768xf32, #tpu.memory_space<vmem>>, vector<8x384xf32>,
    %c1 = arith.constant 1 : index
    %c0_8 = arith.constant 0 : index
    %c0_9 = arith.constant 0 : index
    %21 = vector.load %arg0[%c1, %c0_8, %c0_9] : memref<2x4x426xf32, #tpu.memory_space<vmem>>, vector<1x4x426xf32>
    %22 = vector.shape_cast %21 : vector<1x4x426xf32> to vector<4x426xf32>
    %23 = vector.extract_strided_slice %22 {offsets = [0, 0], sizes = [4, 384], strides = [1, 1]} : vector<4x426xf32> to vector<4x384xf32>
    %24 = vector.extract_strided_slice %22 {offsets = [0, 1], sizes = [4, 384], strides = [1, 1]} : vector<4x426xf32> to vector<4x384xf32>
    %25 = tpu.concatenate %23, %24 in 0 : vector<4x384xf32>, vector<4x384xf32> -> vector<8x384xf32>
    %c0_10 = arith.constant 0 : index
    %c384 = arith.constant 384 : index
    %26 = vector.load %arg5[%c0_10, %c384] : memref<40x768xf32, #tpu.memory_space<vmem>>, vector<8x384xf32>
    tpu.vector_store %arg5[%c0_10, %c384], %25 {strides = array<i32>} : memref<40x768xf32, #tpu.memory_space<vmem>>, vector<8x384xf32>,
    %27 = vector.extract_strided_slice %22 {offsets = [0, 2], sizes = [4, 384], strides = [1, 1]} : vector<4x426xf32> to vector<4x384xf32>
    %28 = vector.extract_strided_slice %22 {offsets = [0, 20], sizes = [4, 384], strides = [1, 1]} : vector<4x426xf32> to vector<4x384xf32>
    %29 = tpu.concatenate %27, %28 in 0 : vector<4x384xf32>, vector<4x384xf32> -> vector<8x384xf32>
    %c8_11 = arith.constant 8 : index
    %c384_12 = arith.constant 384 : index
    %30 = vector.load %arg5[%c8_11, %c384_12] : memref<40x768xf32, #tpu.memory_space<vmem>>, vector<8x384xf32>
    tpu.vector_store %arg5[%c8_11, %c384_12], %29 {strides = array<i32>} : memref<40x768xf32, #tpu.memory_space<vmem>>, vector<8x384xf32>,
    %31 = vector.extract_strided_slice %22 {offsets = [0, 21], sizes = [4, 384], strides = [1, 1]} : vector<4x426xf32> to vector<4x384xf32>
    %32 = vector.extract_strided_slice %22 {offsets = [0, 22], sizes = [4, 384], strides = [1, 1]} : vector<4x426xf32> to vector<4x384xf32>
    %33 = tpu.concatenate %31, %32 in 0 : vector<4x384xf32>, vector<4x384xf32> -> vector<8x384xf32>
    %c16_13 = arith.constant 16 : index
    %c384_14 = arith.constant 384 : index
    %34 = vector.load %arg5[%c16_13, %c384_14] : memref<40x768xf32, #tpu.memory_space<vmem>>, vector<8x384xf32>
    tpu.vector_store %arg5[%c16_13, %c384_14], %33 {strides = array<i32>} : memref<40x768xf32, #tpu.memory_space<vmem>>, vector<8x384xf32>,
    %35 = vector.extract_strided_slice %22 {offsets = [0, 40], sizes = [4, 384], strides = [1, 1]} : vector<4x426xf32> to vector<4x384xf32>
    %36 = vector.extract_strided_slice %22 {offsets = [0, 41], sizes = [4, 384], strides = [1, 1]} : vector<4x426xf32> to vector<4x384xf32>
    %37 = tpu.concatenate %35, %36 in 0 : vector<4x384xf32>, vector<4x384xf32> -> vector<8x384xf32>
    %c24_15 = arith.constant 24 : index
    %c384_16 = arith.constant 384 : index
    %38 = vector.load %arg5[%c24_15, %c384_16] : memref<40x768xf32, #tpu.memory_space<vmem>>, vector<8x384xf32>
    tpu.vector_store %arg5[%c24_15, %c384_16], %37 {strides = array<i32>} : memref<40x768xf32, #tpu.memory_space<vmem>>, vector<8x384xf32>,
    %39 = vector.extract_strided_slice %22 {offsets = [0, 42], sizes = [4, 384], strides = [1, 1]} : vector<4x426xf32> to vector<4x384xf32>
    %40 = tpu.concatenate %39, %39 in 0 : vector<4x384xf32>, vector<4x384xf32> -> vector<8x384xf32>
    %c32_17 = arith.constant 32 : index
    %c384_18 = arith.constant 384 : index
    %41 = vector.load %arg5[%c32_17, %c384_18] : memref<40x768xf32, #tpu.memory_space<vmem>>, vector<8x384xf32>
    tpu.vector_store %arg5[%c32_17, %c384_18], %40 {strides = array<i32>} : memref<40x768xf32, #tpu.memory_space<vmem>>, vector<8x384xf32>,
    %c0_19 = arith.constant 0 : index
    %c0_20 = arith.constant 0 : index
    %42 = vector.load %arg1[%c0_19, %c0_20] : memref<8x40xf32, #tpu.memory_space<vmem>>, vector<8x40xf32>
    %c0_21 = arith.constant 0 : index
    %c0_22 = arith.constant 0 : index
    %43 = vector.load %arg5[%c0_21, %c0_22] : memref<40x768xf32, #tpu.memory_space<vmem>>, vector<40x768xf32>
    %cst = arith.constant dense<0.000000e+00> : vector<8x768xf32>
    %44 = tpu.matmul %42, %43, %cst {dimension_numbers = #tpu.dot_dimension_numbers<[1], [0], [0], [1], [0, 0, 1, 1], [], []>} : vector<8x40xf32>, vector<40x768xf32>, vector<8x768xf32> -> vector<8x768xf32>
    %c0_23 = arith.constant 0 : index
    %c0_24 = arith.constant 0 : index
    %45 = vector.load %arg3[%c0_23, %c0_24] : memref<1x768xf32, #tpu.memory_space<vmem>>, vector<1x768xf32>
    %46 = vector.broadcast %45 : vector<1x768xf32> to vector<8x768xf32>
    %47 = arith.mulf %44, %46 : vector<8x768xf32>
    %cst_25 = arith.constant dense<0.000000e+00> : vector<8xf32>
    %48 = vector.multi_reduction <add>, %47, %cst_25 [1] : vector<8x768xf32> to vector<8xf32>
    %49 = vector.shape_cast %48 : vector<8xf32> to vector<8x1xf32>
    %50 = arith.mulf %47, %44 : vector<8x768xf32>
    %cst_26 = arith.constant dense<0.000000e+00> : vector<8xf32>
    %51 = vector.multi_reduction <add>, %50, %cst_26 [1] : vector<8x768xf32> to vector<8xf32>
    %52 = vector.shape_cast %51 : vector<8xf32> to vector<8x1xf32>
    %cst_27 = arith.constant 0.00154320989 : f32
    %53 = vector.broadcast %cst_27 : f32 to vector<8x1xf32>
    %54 = arith.mulf %49, %53 : vector<8x1xf32>
    %cst_28 = arith.constant 0.00154320989 : f32
    %55 = vector.broadcast %cst_28 : f32 to vector<8x1xf32>
    %56 = arith.mulf %52, %55 : vector<8x1xf32>
    %57 = arith.mulf %54, %54 : vector<8x1xf32>
    %58 = arith.subf %56, %57 : vector<8x1xf32>
    %c0_29 = arith.constant 0 : index
    %c0_30 = arith.constant 0 : index
    %c0_31 = arith.constant 0 : index
    %59 = vector.load %arg2[%c0_29, %c0_30, %c0_31] : memref<2x8x1xf32, #tpu.memory_space<vmem>>, vector<2x8x1xf32>
    %60 = vector.extract_strided_slice %59 {offsets = [0, 0, 0], sizes = [1, 8, 1], strides = [1, 1, 1]} : vector<2x8x1xf32> to vector<1x8x1xf32>
    %61 = vector.shape_cast %60 : vector<1x8x1xf32> to vector<8x1xf32>
    %cst_32 = arith.constant 9.99999974E-6 : f32
    %62 = vector.broadcast %cst_32 : f32 to vector<8x1xf32>
    %63 = arith.addf %58, %62 : vector<8x1xf32>
    %64 = math.rsqrt %63 : vector<8x1xf32>
    %65 = arith.mulf %61, %64 : vector<8x1xf32>
    %66 = vector.extract_strided_slice %59 {offsets = [1, 0, 0], sizes = [1, 8, 1], strides = [1, 1, 1]} : vector<2x8x1xf32> to vector<1x8x1xf32>
    %67 = vector.shape_cast %66 : vector<1x8x1xf32> to vector<8x1xf32>
    %68 = arith.mulf %54, %65 : vector<8x1xf32>
    %69 = arith.subf %67, %68 : vector<8x1xf32>
    %70 = vector.broadcast %65 : vector<8x1xf32> to vector<8x768xf32>
    %71 = arith.mulf %44, %70 : vector<8x768xf32>
    %72 = vector.broadcast %69 : vector<8x1xf32> to vector<8x768xf32>
    %73 = arith.addf %71, %72 : vector<8x768xf32>
    %c0_33 = arith.constant 0 : index
    %c0_34 = arith.constant 0 : index
    %74 = vector.load %arg4[%c0_33, %c0_34] : memref<8x768xf32, #tpu.memory_space<vmem>>, vector<8x768xf32>
    tpu.vector_store %arg4[%c0_33, %c0_34], %73 {strides = array<i32>} : memref<8x768xf32, #tpu.memory_space<vmem>>, vector<8x768xf32>,
    return
  }
}

</mosaic_0001>

<llo_original>
// kernel: upconv_block_2d.1
$region0: #{upconv_block_2d.1}
  #allocation0 [shape = 'u32[]', space=smem, size = 0x4, offset = 0x4, fixed_abs, tag = 'smem constant byte address 0x4 - core index']
  #allocation1 [shape = 'u32[144,128]{1,0:T(1,128)}', space=vmem, size = 0x12000, scoped, tag = 'internal scratch']
  #allocation2 [shape = 'f32[40,768]{1,0:T(8,128)}', space=vmem, size = 0x1e000, scoped, tag = 'scratch operand']
  %s0 = inlined_call_operand.vmem [shape: f32[2,4,426], index: 0, kind: input, shape index: {}]
  %s1 = inlined_call_operand.vmem [shape: f32[8,40], index: 1, kind: input, shape index: {}]
  %s2 = inlined_call_operand.vmem [shape: f32[2,8,1], index: 2, kind: input, shape index: {}]
  %s3 = inlined_call_operand.vmem [shape: f32[1,768], index: 3, kind: input, shape index: {}]
  %s4 = inlined_call_operand.vmem [shape: f32[8,768], index: 4, kind: output, shape index: {}]
  %s5 = sld [smem:[#allocation0]]
  $region26: #{upconv_block_2d.1} parent=0
    _
  %s7 = ssub.s32 1, %s5
  %s8 = scalar_select 0, %s7, %s5
  // Predicated region
  $region2: #{upconv_block_2d.1} parent=0 // pred_check
    _
  $region3: #{upconv_block_2d.1} parent=0 // pred_check_branch
    %10 = sbr.rel (0) target = $region5
  $region4: #{upconv_block_2d.1} parent=0 // pred_region
    _
  $region5: #{upconv_block_2d.1} parent=0 // pred_fallthru
    _
  // Predicated region
  $region6: #{upconv_block_2d.1} parent=0 // pred_check
    _
  $region7: #{upconv_block_2d.1} parent=0 // pred_check_branch
    %12 = sbr.rel (0) target = $region9
  $region8: #{upconv_block_2d.1} parent=0 // pred_region
    _
  $region9: #{upconv_block_2d.1} parent=0 // pred_fallthru
    _
  // Predicated region
  $region10: #{upconv_block_2d.1} parent=0 // pred_check
    _
  $region11: #{upconv_block_2d.1} parent=0 // pred_check_branch
    %14 = sbr.rel (0) target = $region13
  $region12: #{upconv_block_2d.1} parent=0 // pred_region
    _
  $region13: #{upconv_block_2d.1} parent=0 // pred_fallthru
    _
  // Predicated region
  $region14: #{upconv_block_2d.1} parent=0 // pred_check
    _
  $region15: #{upconv_block_2d.1} parent=0 // pred_check_branch
    %16 = sbr.rel (0) target = $region17
  $region16: #{upconv_block_2d.1} parent=0 // pred_region
    _
  $region17: #{upconv_block_2d.1} parent=0 // pred_fallthru
    _
  %v17 = vld [vmem:[%s0] sm:$0xff]
  %v18 = vld [vmem:[%s0 + $0x8] sm:$0xff]
  %v21 = vcombine.high %v17, %v17
  %v23 = vcombine.low %v17, %v17
  %v24 = vcombine.low %v18, %v18
  %25 = vrot.lane.b32.xlu0 %v23, 127
  %v26 = vpop.permute.xlu0 %25
  %27 = vrot.lane.b32.xlu0 %v17, 127
  %v28 = vpop.permute.xlu0 %27
  %29 = vrot.lane.b32.xlu0 %v24, 127
  %v30 = vpop.permute.xlu0 %29
  %31 = vrot.lane.b32.xlu0 %v18, 127
  %v32 = vpop.permute.xlu0 %31
  %vm33 = vcmask 1039360
  %v34 = vsel %vm33, %v26, %v28
  %v35 = vsel %vm33, %v28, %v30
  %v36 = vsel %vm33, %v30, %v32
  %vm40 = vcmask 1043456
  %v41 = vsel %vm40, %v17, %v34
  %v42 = vsel %vm40, %v21, %v35
  %v43 = vsel %vm40, %v18, %v36
  %44 = vst [vmem:[#allocation2] sm:$0xff] %v41
  %45 = vst [vmem:[#allocation2 + $0x8] sm:$0xff] %v42
  %46 = vst [vmem:[#allocation2 + $0x10] sm:$0xff] %v43
  %v47 = vcombine.high %v18, %v18
  %49 = vrot.lane.b32.xlu0 %v23, 110
  %v50 = vpop.permute.xlu0 %49
  %51 = vrot.lane.b32.xlu0 %v17, 110
  %v52 = vpop.permute.xlu0 %51
  %53 = vrot.lane.b32.xlu0 %v24, 110
  %v54 = vpop.permute.xlu0 %53
  %55 = vrot.lane.b32.xlu0 %v18, 110
  %v56 = vpop.permute.xlu0 %55
  %vm57 = vcmask 900096
  %v58 = vsel %vm57, %v50, %v52
  %v59 = vsel %vm57, %v52, %v54
  %v60 = vsel %vm57, %v54, %v56
  %v65 = vsel %vm40, %v17, %v58
  %v66 = vsel %vm40, %v21, %v59
  %v67 = vsel %vm40, %v18, %v60
  %v68 = vsel %vm40, %v47, %v56
  %73 = vrot.lane.b32.xlu0 %v65, 126
  %v74 = vpop.permute.xlu0 %73
  %75 = vrot.lane.b32.xlu0 %v66, 126
  %v76 = vpop.permute.xlu0 %75
  %77 = vrot.lane.b32.xlu0 %v67, 126
  %v78 = vpop.permute.xlu0 %77
  %79 = vrot.lane.b32.xlu0 %v68, 126
  %v80 = vpop.permute.xlu0 %79
  %vm81 = vcmask 1031168
  %v82 = vsel %vm81, %v74, %v76
  %v83 = vsel %vm81, %v76, %v78
  %v84 = vsel %vm81, %v78, %v80
  %88 = vst [vmem:[#allocation2 + $0x30] sm:$0xff] %v82
  %89 = vst [vmem:[#allocation2 + $0x38] sm:$0xff] %v83
  %90 = vst [vmem:[#allocation2 + $0x40] sm:$0xff] %v84
  %v92 = vsel %vm40, %v47, %v32
  %97 = vrot.lane.b32.xlu0 %v41, 107
  %v98 = vpop.permute.xlu0 %97
  %99 = vrot.lane.b32.xlu0 %v42, 107
  %v100 = vpop.permute.xlu0 %99
  %101 = vrot.lane.b32.xlu0 %v43, 107
  %v102 = vpop.permute.xlu0 %101
  %103 = vrot.lane.b32.xlu0 %v92, 107
  %v104 = vpop.permute.xlu0 %103
  %vm105 = vcmask 875520
  %v106 = vsel %vm105, %v98, %v100
  %v107 = vsel %vm105, %v100, %v102
  %v108 = vsel %vm105, %v102, %v104
  %112 = vst [vmem:[#allocation2 + $0x60] sm:$0xff] %v106
  %113 = vst [vmem:[#allocation2 + $0x68] sm:$0xff] %v107
  %114 = vst [vmem:[#allocation2 + $0x70] sm:$0xff] %v108
  %115 = vrot.lane.b32.xlu0 %v41, 88
  %v116 = vpop.permute.xlu0 %115
  %117 = vrot.lane.b32.xlu0 %v42, 88
  %v118 = vpop.permute.xlu0 %117
  %119 = vrot.lane.b32.xlu0 %v43, 88
  %v120 = vpop.permute.xlu0 %119
  %121 = vrot.lane.b32.xlu0 %v92, 88
  %v122 = vpop.permute.xlu0 %121
  %vm123 = vcmask 719872
  %v124 = vsel %vm123, %v116, %v118
  %v125 = vsel %vm123, %v118, %v120
  %v126 = vsel %vm123, %v120, %v122
  %130 = vst [vmem:[#allocation2 + $0x90] sm:$0xff] %v124
  %131 = vst [vmem:[#allocation2 + $0x98] sm:$0xff] %v125
  %132 = vst [vmem:[#allocation2 + $0xa0] sm:$0xff] %v126
  %v135 = vsel %vm40, %v17, %v23
  %v136 = vsel %vm40, %v21, %v17
  %v137 = vsel %vm40, %v18, %v24
  %v138 = vsel %vm40, %v47, %v18
  %143 = vrot.lane.b32.xlu0 %v135, 86
  %v144 = vpop.permute.xlu0 %143
  %145 = vrot.lane.b32.xlu0 %v136, 86
  %v146 = vpop.permute.xlu0 %145
  %147 = vrot.lane.b32.xlu0 %v137, 86
  %v148 = vpop.permute.xlu0 %147
  %149 = vrot.lane.b32.xlu0 %v138, 86
  %v150 = vpop.permute.xlu0 %149
  %vm151 = vcmask 703488
  %v152 = vsel %vm151, %v144, %v146
  %v153 = vsel %vm151, %v146, %v148
  %v154 = vsel %vm151, %v148, %v150
  %158 = vst [vmem:[#allocation2 + $0xc0] sm:$0xff] %v152
  %159 = vst [vmem:[#allocation2 + $0xc8] sm:$0xff] %v153
  %160 = vst [vmem:[#allocation2 + $0xd0] sm:$0xff] %v154
  %s161 = scalar_lea.vmem %s0, 16
  %v162 = vld [vmem:[%s161] sm:$0xff]
  %v163 = vld [vmem:[%s161 + $0x8] sm:$0xff]
  %v166 = vcombine.high %v162, %v162
  %v168 = vcombine.low %v162, %v162
  %v169 = vcombine.low %v163, %v163
  %170 = vrot.lane.b32.xlu0 %v168, 127
  %v171 = vpop.permute.xlu0 %170
  %172 = vrot.lane.b32.xlu0 %v162, 127
  %v173 = vpop.permute.xlu0 %172
  %174 = vrot.lane.b32.xlu0 %v169, 127
  %v175 = vpop.permute.xlu0 %174
  %176 = vrot.lane.b32.xlu0 %v163, 127
  %v177 = vpop.permute.xlu0 %176
  %v178 = vsel %vm33, %v171, %v173
  %v179 = vsel %vm33, %v173, %v175
  %v180 = vsel %vm33, %v175, %v177
  %v184 = vsel %vm40, %v162, %v178
  %v185 = vsel %vm40, %v166, %v179
  %v186 = vsel %vm40, %v163, %v180
  %187 = vst [vmem:[#allocation2 + $0x18] sm:$0xff] %v184
  %188 = vst [vmem:[#allocation2 + $0x20] sm:$0xff] %v185
  %189 = vst [vmem:[#allocation2 + $0x28] sm:$0xff] %v186
  %v190 = vcombine.high %v163, %v163
  %192 = vrot.lane.b32.xlu0 %v168, 110
  %v193 = vpop.permute.xlu0 %192
  %194 = vrot.lane.b32.xlu0 %v162, 110
  %v195 = vpop.permute.xlu0 %194
  %196 = vrot.lane.b32.xlu0 %v169, 110
  %v197 = vpop.permute.xlu0 %196
  %198 = vrot.lane.b32.xlu0 %v163, 110
  %v199 = vpop.permute.xlu0 %198
  %v200 = vsel %vm57, %v193, %v195
  %v201 = vsel %vm57, %v195, %v197
  %v202 = vsel %vm57, %v197, %v199
  %v207 = vsel %vm40, %v162, %v200
  %v208 = vsel %vm40, %v166, %v201
  %v209 = vsel %vm40, %v163, %v202
  %v210 = vsel %vm40, %v190, %v199
  %215 = vrot.lane.b32.xlu0 %v207, 126
  %v216 = vpop.permute.xlu0 %215
  %217 = vrot.lane.b32.xlu0 %v208, 126
  %v218 = vpop.permute.xlu0 %217
  %219 = vrot.lane.b32.xlu0 %v209, 126
  %v220 = vpop.permute.xlu0 %219
  %221 = vrot.lane.b32.xlu0 %v210, 126
  %v222 = vpop.permute.xlu0 %221
  %v223 = vsel %vm81, %v216, %v218
  %v224 = vsel %vm81, %v218, %v220
  %v225 = vsel %vm81, %v220, %v222
  %229 = vst [vmem:[#allocation2 + $0x48] sm:$0xff] %v223
  %230 = vst [vmem:[#allocation2 + $0x50] sm:$0xff] %v224
  %231 = vst [vmem:[#allocation2 + $0x58] sm:$0xff] %v225
  %v233 = vsel %vm40, %v190, %v177
  %238 = vrot.lane.b32.xlu0 %v184, 107
  %v239 = vpop.permute.xlu0 %238
  %240 = vrot.lane.b32.xlu0 %v185, 107
  %v241 = vpop.permute.xlu0 %240
  %242 = vrot.lane.b32.xlu0 %v186, 107
  %v243 = vpop.permute.xlu0 %242
  %244 = vrot.lane.b32.xlu0 %v233, 107
  %v245 = vpop.permute.xlu0 %244
  %v246 = vsel %vm105, %v239, %v241
  %v247 = vsel %vm105, %v241, %v243
  %v248 = vsel %vm105, %v243, %v245
  %252 = vst [vmem:[#allocation2 + $0x78] sm:$0xff] %v246
  %253 = vst [vmem:[#allocation2 + $0x80] sm:$0xff] %v247
  %254 = vst [vmem:[#allocation2 + $0x88] sm:$0xff] %v248
  %255 = vrot.lane.b32.xlu0 %v184, 88
  %v256 = vpop.permute.xlu0 %255
  %257 = vrot.lane.b32.xlu0 %v185, 88
  %v258 = vpop.permute.xlu0 %257
  %259 = vrot.lane.b32.xlu0 %v186, 88
  %v260 = vpop.permute.xlu0 %259
  %261 = vrot.lane.b32.xlu0 %v233, 88
  %v262 = vpop.permute.xlu0 %261
  %v263 = vsel %vm123, %v256, %v258
  %v264 = vsel %vm123, %v258, %v260
  %v265 = vsel %vm123, %v260, %v262
  %269 = vst [vmem:[#allocation2 + $0xa8] sm:$0xff] %v263
  %270 = vst [vmem:[#allocation2 + $0xb0] sm:$0xff] %v264
  %271 = vst [vmem:[#allocation2 + $0xb8] sm:$0xff] %v265
  %v274 = vsel %vm40, %v162, %v168
  %v275 = vsel %vm40, %v166, %v162
  %v276 = vsel %vm40, %v163, %v169
  %v277 = vsel %vm40, %v190, %v163
  %282 = vrot.lane.b32.xlu0 %v274, 86
  %v283 = vpop.permute.xlu0 %282
  %284 = vrot.lane.b32.xlu0 %v275, 86
  %v285 = vpop.permute.xlu0 %284
  %286 = vrot.lane.b32.xlu0 %v276, 86
  %v287 = vpop.permute.xlu0 %286
  %288 = vrot.lane.b32.xlu0 %v277, 86
  %v289 = vpop.permute.xlu0 %288
  %v290 = vsel %vm151, %v283, %v285
  %v291 = vsel %vm151, %v285, %v287
  %v292 = vsel %vm151, %v287, %v289
  %296 = vst [vmem:[#allocation2 + $0xd8] sm:$0xff] %v290
  %297 = vst [vmem:[#allocation2 + $0xe0] sm:$0xff] %v291
  %298 = vst [vmem:[#allocation2 + $0xe8] sm:$0xff] %v292
  %v299 = vld [vmem:[%s1] sm:$0xff]
  %v300 = vld [vmem:[#allocation2] sm:$0xff]
  %v301 = vld [vmem:[#allocation2 + $0x8] sm:$0xff]
  %v302 = vld [vmem:[#allocation2 + $0x10] sm:$0xff]
  %v303 = vld [vmem:[#allocation2 + $0x18] sm:$0xff]
  %v304 = vld [vmem:[#allocation2 + $0x20] sm:$0xff]
  %v305 = vld [vmem:[#allocation2 + $0x28] sm:$0xff]
  %v306 = vld [vmem:[#allocation2 + $0x30] sm:$0xff]
  %v307 = vld [vmem:[#allocation2 + $0x38] sm:$0xff]
  %v308 = vld [vmem:[#allocation2 + $0x40] sm:$0xff]
  %v309 = vld [vmem:[#allocation2 + $0x48] sm:$0xff]
  %v310 = vld [vmem:[#allocation2 + $0x50] sm:$0xff]
  %v311 = vld [vmem:[#allocation2 + $0x58] sm:$0xff]
  %v312 = vld [vmem:[#allocation2 + $0x60] sm:$0xff]
  %v313 = vld [vmem:[#allocation2 + $0x68] sm:$0xff]
  %v314 = vld [vmem:[#allocation2 + $0x70] sm:$0xff]
  %v315 = vld [vmem:[#allocation2 + $0x78] sm:$0xff]
  %v316 = vld [vmem:[#allocation2 + $0x80] sm:$0xff]
  %v317 = vld [vmem:[#allocation2 + $0x88] sm:$0xff]
  %v318 = vld [vmem:[#allocation2 + $0x90] sm:$0xff]
  %v319 = vld [vmem:[#allocation2 + $0x98] sm:$0xff]
  %v320 = vld [vmem:[#allocation2 + $0xa0] sm:$0xff]
  %v321 = vld [vmem:[#allocation2 + $0xa8] sm:$0xff]
  %v322 = vld [vmem:[#allocation2 + $0xb0] sm:$0xff]
  %v323 = vld [vmem:[#allocation2 + $0xb8] sm:$0xff]
  %v324 = vld [vmem:[#allocation2 + $0xc0] sm:$0xff]
  %v325 = vld [vmem:[#allocation2 + $0xc8] sm:$0xff]
  %v326 = vld [vmem:[#allocation2 + $0xd0] sm:$0xff]
  %v327 = vld [vmem:[#allocation2 + $0xd8] sm:$0xff]
  %v328 = vld [vmem:[#allocation2 + $0xe0] sm:$0xff]
  %v329 = vld [vmem:[#allocation2 + $0xe8] sm:$0xff]
  %vm330 = vcmask 326656
  %v332 = vsel %vm330, %v299, 0
  %334 = vmatprep.subr.mxu0 %v301
  %335 = vmatpush1.msra.mxu0 %v300
  %336 = vmatprep.subr.mxu0 %v307
  %337 = vmatpush1.msra.mxu0 %v306
  %338 = vmatprep.subr.mxu0 %v313
  %339 = vmatpush1.msra.mxu0 %v312
  %340 = vmatprep.subr.mxu0 %v319
  %341 = vmatpush1.msra.mxu0 %v318
  %342 = vmatprep.subr.mxu0 %v325
  %343 = vmatpush1.msra.mxu0 %v324
  %344 = vmatprep.subr.mxu0 0.0
  %345 = vmatpush1.msra.mxu0 0.0
  %346 = vmatprep.subr.mxu0 0.0
  %347 = vmatpush1.msra.mxu0 0.0
  %348 = vmatprep.subr.mxu0 0.0
  %349 = vmatpush1.msra.mxu0 0.0
  %350 = vmatprep.subr.mxu0 0.0
  %351 = vmatpush1.msra.mxu0 0.0
  %352 = vmatprep.subr.mxu0 0.0
  %353 = vmatpush1.msra.mxu0 0.0
  %354 = vmatprep.subr.mxu0 0.0
  %355 = vmatpush1.msra.mxu0 0.0
  %356 = vmatprep.subr.mxu0 0.0
  %357 = vmatpush1.msra.mxu0 0.0
  %358 = vmatprep.subr.mxu0 0.0
  %359 = vmatpush1.msra.mxu0 0.0
  %360 = vmatprep.subr.mxu0 0.0
  %361 = vmatpush1.msra.mxu0 0.0
  %362 = vmatprep.subr.mxu0 0.0
  %363 = vmatpush1.msra.mxu0 0.0
  %364 = vmatprep.subr.mxu0 0.0
  %365 = vmatpush1.msra.mxu0 0.0
  %366 = vmatprep.subr.mxu0 0.0
  %367 = vmatpush1.msra.mxu0 0.0
  %368 = vmatprep.subr.mxu0 0.0
  %369 = vmatpush1.msra.mxu0 0.0
  %370 = vmatprep.subr.mxu0 0.0
  %371 = vmatpush1.msra.mxu0 0.0
  %372 = vmatprep.subr.mxu0 0.0
  %373 = vmatpush1.msra.mxu0 0.0
  %374 = vmatprep.subr.mxu0 0.0
  %375 = vmatpush1.msra.mxu0 0.0
  %376 = vmatprep.subr.mxu0 0.0
  %377 = vmatpush1.msra.mxu0 0.0
  %378 = vmatprep.subr.mxu0 0.0
  %379 = vmatpush1.msra.mxu0 0.0
  %380 = vmatprep.subr.mxu0 0.0
  %381 = vmatpush1.msra.mxu0 0.0
  %382 = vmatprep.subr.mxu0 0.0
  %383 = vmatpush1.msra.mxu0 0.0
  %384 = vmatprep.subr.mxu0 0.0
  %385 = vmatpush1.msra.mxu0 0.0
  %386 = vmatprep.subr.mxu0 0.0
  %387 = vmatpush1.msra.mxu0 0.0
  %388 = vmatprep.subr.mxu0 0.0
  %389 = vmatpush1.msra.mxu0 0.0
  %390 = vmatprep.subr.mxu0 0.0
  %391 = vmatpush1.msra.mxu0 0.0
  %392 = vmatprep.subr.mxu0 0.0
  %393 = vmatpush1.msra.mxu0 0.0
  %394 = vmatprep.subr.mxu0 0.0
  %395 = vmatpush1.msra.mxu0 0.0
  %396 = vmatprep.subr.mxu0 0.0
  %397 = vmatpush1.msra.mxu0 0.0
  %398 = vmatprep.mubr.f32.mxu0 0.0
  %399 = vmatmul.mubr.f32.gmra.mrb[0].mxu0 %v332
  %v400 = vpop.f32.mrb[0].mxu0
  %v401 = vadd.f32 0.0, %v400
  %v402 = vpop.f32.mrb[0].mxu0
  %v403 = vadd.f32 0.0, %v402
  %404 = vdwg.mxu0
  %405 = vmatprep.subr.mxu0 %v303
  %406 = vmatpush1.msra.mxu0 %v302
  %407 = vmatprep.subr.mxu0 %v309
  %408 = vmatpush1.msra.mxu0 %v308
  %409 = vmatprep.subr.mxu0 %v315
  %410 = vmatpush1.msra.mxu0 %v314
  %411 = vmatprep.subr.mxu0 %v321
  %412 = vmatpush1.msra.mxu0 %v320
  %413 = vmatprep.subr.mxu0 %v327
  %414 = vmatpush1.msra.mxu0 %v326
  %415 = vmatprep.subr.mxu0 0.0
  %416 = vmatpush1.msra.mxu0 0.0
  %417 = vmatprep.subr.mxu0 0.0
  %418 = vmatpush1.msra.mxu0 0.0
  %419 = vmatprep.subr.mxu0 0.0
  %420 = vmatpush1.msra.mxu0 0.0
  %421 = vmatprep.subr.mxu0 0.0
  %422 = vmatpush1.msra.mxu0 0.0
  %423 = vmatprep.subr.mxu0 0.0
  %424 = vmatpush1.msra.mxu0 0.0
  %425 = vmatprep.subr.mxu0 0.0
  %426 = vmatpush1.msra.mxu0 0.0
  %427 = vmatprep.subr.mxu0 0.0
  %428 = vmatpush1.msra.mxu0 0.0
  %429 = vmatprep.subr.mxu0 0.0
  %430 = vmatpush1.msra.mxu0 0.0
  %431 = vmatprep.subr.mxu0 0.0
  %432 = vmatpush1.msra.mxu0 0.0
  %433 = vmatprep.subr.mxu0 0.0
  %434 = vmatpush1.msra.mxu0 0.0
  %435 = vmatprep.subr.mxu0 0.0
  %436 = vmatpush1.msra.mxu0 0.0
  %437 = vmatprep.subr.mxu0 0.0
  %438 = vmatpush1.msra.mxu0 0.0
  %439 = vmatprep.subr.mxu0 0.0
  %440 = vmatpush1.msra.mxu0 0.0
  %441 = vmatprep.subr.mxu0 0.0
  %442 = vmatpush1.msra.mxu0 0.0
  %443 = vmatprep.subr.mxu0 0.0
  %444 = vmatpush1.msra.mxu0 0.0
  %445 = vmatprep.subr.mxu0 0.0
  %446 = vmatpush1.msra.mxu0 0.0
  %447 = vmatprep.subr.mxu0 0.0
  %448 = vmatpush1.msra.mxu0 0.0
  %449 = vmatprep.subr.mxu0 0.0
  %450 = vmatpush1.msra.mxu0 0.0
  %451 = vmatprep.subr.mxu0 0.0
  %452 = vmatpush1.msra.mxu0 0.0
  %453 = vmatprep.subr.mxu0 0.0
  %454 = vmatpush1.msra.mxu0 0.0
  %455 = vmatprep.subr.mxu0 0.0
  %456 = vmatpush1.msra.mxu0 0.0
  %457 = vmatprep.subr.mxu0 0.0
  %458 = vmatpush1.msra.mxu0 0.0
  %459 = vmatprep.subr.mxu0 0.0
  %460 = vmatpush1.msra.mxu0 0.0
  %461 = vmatprep.subr.mxu0 0.0
  %462 = vmatpush1.msra.mxu0 0.0
  %463 = vmatprep.subr.mxu0 0.0
  %464 = vmatpush1.msra.mxu0 0.0
  %465 = vmatprep.subr.mxu0 0.0
  %466 = vmatpush1.msra.mxu0 0.0
  %467 = vmatprep.subr.mxu0 0.0
  %468 = vmatpush1.msra.mxu0 0.0
  %469 = vmatprep.mubr.f32.mxu0 0.0
  %470 = vmatmul.mubr.f32.gmra.mrb[0].mxu0 %v332
  %v471 = vpop.f32.mrb[0].mxu0
  %v472 = vadd.f32 0.0, %v471
  %v473 = vpop.f32.mrb[0].mxu0
  %v474 = vadd.f32 0.0, %v473
  %475 = vdwg.mxu0
  %476 = vmatprep.subr.mxu0 %v305
  %477 = vmatpush1.msra.mxu0 %v304
  %478 = vmatprep.subr.mxu0 %v311
  %479 = vmatpush1.msra.mxu0 %v310
  %480 = vmatprep.subr.mxu0 %v317
  %481 = vmatpush1.msra.mxu0 %v316
  %482 = vmatprep.subr.mxu0 %v323
  %483 = vmatpush1.msra.mxu0 %v322
  %484 = vmatprep.subr.mxu0 %v329
  %485 = vmatpush1.msra.mxu0 %v328
  %486 = vmatprep.subr.mxu0 0.0
  %487 = vmatpush1.msra.mxu0 0.0
  %488 = vmatprep.subr.mxu0 0.0
  %489 = vmatpush1.msra.mxu0 0.0
  %490 = vmatprep.subr.mxu0 0.0
  %491 = vmatpush1.msra.mxu0 0.0
  %492 = vmatprep.subr.mxu0 0.0
  %493 = vmatpush1.msra.mxu0 0.0
  %494 = vmatprep.subr.mxu0 0.0
  %495 = vmatpush1.msra.mxu0 0.0
  %496 = vmatprep.subr.mxu0 0.0
  %497 = vmatpush1.msra.mxu0 0.0
  %498 = vmatprep.subr.mxu0 0.0
  %499 = vmatpush1.msra.mxu0 0.0
  %500 = vmatprep.subr.mxu0 0.0
  %501 = vmatpush1.msra.mxu0 0.0
  %502 = vmatprep.subr.mxu0 0.0
  %503 = vmatpush1.msra.mxu0 0.0
  %504 = vmatprep.subr.mxu0 0.0
  %505 = vmatpush1.msra.mxu0 0.0
  %506 = vmatprep.subr.mxu0 0.0
  %507 = vmatpush1.msra.mxu0 0.0
  %508 = vmatprep.subr.mxu0 0.0
  %509 = vmatpush1.msra.mxu0 0.0
  %510 = vmatprep.subr.mxu0 0.0
  %511 = vmatpush1.msra.mxu0 0.0
  %512 = vmatprep.subr.mxu0 0.0
  %513 = vmatpush1.msra.mxu0 0.0
  %514 = vmatprep.subr.mxu0 0.0
  %515 = vmatpush1.msra.mxu0 0.0
  %516 = vmatprep.subr.mxu0 0.0
  %517 = vmatpush1.msra.mxu0 0.0
  %518 = vmatprep.subr.mxu0 0.0
  %519 = vmatpush1.msra.mxu0 0.0
  %520 = vmatprep.subr.mxu0 0.0
  %521 = vmatpush1.msra.mxu0 0.0
  %522 = vmatprep.subr.mxu0 0.0
  %523 = vmatpush1.msra.mxu0 0.0
  %524 = vmatprep.subr.mxu0 0.0
  %525 = vmatpush1.msra.mxu0 0.0
  %526 = vmatprep.subr.mxu0 0.0
  %527 = vmatpush1.msra.mxu0 0.0
  %528 = vmatprep.subr.mxu0 0.0
  %529 = vmatpush1.msra.mxu0 0.0
  %530 = vmatprep.subr.mxu0 0.0
  %531 = vmatpush1.msra.mxu0 0.0
  %532 = vmatprep.subr.mxu0 0.0
  %533 = vmatpush1.msra.mxu0 0.0
  %534 = vmatprep.subr.mxu0 0.0
  %535 = vmatpush1.msra.mxu0 0.0
  %536 = vmatprep.subr.mxu0 0.0
  %537 = vmatpush1.msra.mxu0 0.0
  %538 = vmatprep.subr.mxu0 0.0
  %539 = vmatpush1.msra.mxu0 0.0
  %540 = vmatprep.mubr.f32.mxu0 0.0
  %541 = vmatmul.mubr.f32.gmra.mrb[0].mxu0 %v332
  %v542 = vpop.f32.mrb[0].mxu0
  %v543 = vadd.f32 0.0, %v542
  %v544 = vpop.f32.mrb[0].mxu0
  %v545 = vadd.f32 0.0, %v544
  %546 = vdwg.mxu0
  %v547 = vld [vmem:[%s3] sm:$0x3f]
  %v549 = vlaneseq
  %v550 = vshrl.u32 %v549, 7
  %v551 = vsub.s32 0, %v550
  %v552 = vrot.slane %v547, %v551
  %v553 = vlaneseq
  %v554 = vshrl.u32 %v553, 7
  %v555 = vsub.s32 1, %v554
  %v556 = vrot.slane %v547, %v555
  %v557 = vlaneseq
  %v558 = vshrl.u32 %v557, 7
  %v559 = vsub.s32 2, %v558
  %v560 = vrot.slane %v547, %v559
  %v561 = vlaneseq
  %v562 = vshrl.u32 %v561, 7
  %v563 = vsub.s32 3, %v562
  %v564 = vrot.slane %v547, %v563
  %v565 = vlaneseq
  %v566 = vshrl.u32 %v565, 7
  %v567 = vsub.s32 4, %v566
  %v568 = vrot.slane %v547, %v567
  %v569 = vlaneseq
  %v570 = vshrl.u32 %v569, 7
  %v571 = vsub.s32 5, %v570
  %v572 = vrot.slane %v547, %v571
  %v579 = vmul.f32 %v401, %v552
  %v580 = vmul.f32 %v403, %v556
  %v581 = vmul.f32 %v472, %v560
  %v582 = vmul.f32 %v474, %v564
  %v583 = vmul.f32 %v543, %v568
  %v584 = vmul.f32 %v545, %v572
  %v585 = vadd.f32 %v579, %v580
  %v586 = vadd.f32 %v585, %v581
  %v587 = vadd.f32 %v586, %v582
  %v588 = vadd.f32 %v587, %v583
  %v589 = vadd.f32 %v588, %v584
  %590 = vadd.xlane.f32.xlu0 %v589
  %v591 = vpop.xlane.xlu0 %590
  %v592 = vmul.f32 %v579, %v401
  %v593 = vmul.f32 %v580, %v403
  %v594 = vmul.f32 %v581, %v472
  %v595 = vmul.f32 %v582, %v474
  %v596 = vmul.f32 %v583, %v543
  %v597 = vmul.f32 %v584, %v545
  %v598 = vadd.f32 %v592, %v593
  %v599 = vadd.f32 %v598, %v594
  %v600 = vadd.f32 %v599, %v595
  %v601 = vadd.f32 %v600, %v596
  %v602 = vadd.f32 %v601, %v597
  %603 = vadd.xlane.f32.xlu0 %v602
  %v604 = vpop.xlane.xlu0 %603
  %v605 = vmul.f32 %v591, 0.0015432099
  %v606 = vmul.f32 %v604, 0.0015432099
  %v607 = vmul.f32 %v605, %v605
  %v608 = vsub.f32 %v606, %v607
  %v609 = vld [vmem:[%s2] sm:$0xff]
  %v610 = vld [vmem:[%s2 + $0x8] sm:$0xff]
  %v611 = vadd.f32 %v608, 1e-05
  %v612 = vrsqrt.pop %v611
  %v613 = vmul.f32 %v609, %v612
  %v614 = vmul.f32 %v605, %v613
  %v615 = vsub.f32 %v610, %v614
  %617 = vset.pattern.permute.xlu0 0
  %618 = vperm.xlu0 %617, %v613
  %v619 = vpop.permute.xlu0 %618
  %v621 = vmul.f32 %v401, %v619
  %v622 = vmul.f32 %v403, %v619
  %v623 = vmul.f32 %v472, %v619
  %v624 = vmul.f32 %v474, %v619
  %v625 = vmul.f32 %v543, %v619
  %v626 = vmul.f32 %v545, %v619
  %628 = vset.pattern.permute.xlu0 0
  %629 = vperm.xlu0 %628, %v615
  %v630 = vpop.permute.xlu0 %629
  %v632 = vadd.f32 %v621, %v630
  %v633 = vadd.f32 %v622, %v630
  %v634 = vadd.f32 %v623, %v630
  %v635 = vadd.f32 %v624, %v630
  %v636 = vadd.f32 %v625, %v630
  %v637 = vadd.f32 %v626, %v630
  %638 = vst [vmem:[%s4] sm:$0xff] %v632
  %639 = vst [vmem:[%s4 + $0x8] sm:$0xff] %v633
  %640 = vst [vmem:[%s4 + $0x10] sm:$0xff] %v634
  %641 = vst [vmem:[%s4 + $0x18] sm:$0xff] %v635
  %642 = vst [vmem:[%s4 + $0x20] sm:$0xff] %v636
  %643 = vst [vmem:[%s4 + $0x28] sm:$0xff] %v637
  // Predicated region
  $region18: #{upconv_block_2d.1} parent=0 // pred_check
    _
  $region19: #{upconv_block_2d.1} parent=0 // pred_check_branch
    %645 = sbr.rel (0) target = $region21
  $region20: #{upconv_block_2d.1} parent=0 // pred_region
    _
  $region21: #{upconv_block_2d.1} parent=0 // pred_fallthru
    _
  // Predicated region
  $region22: #{upconv_block_2d.1} parent=0 // pred_check
    _
  $region23: #{upconv_block_2d.1} parent=0 // pred_check_branch
    %647 = sbr.rel (0) target = $region25
  $region24: #{upconv_block_2d.1} parent=0 // pred_region
    _
  $region25: #{upconv_block_2d.1} parent=0 // pred_fallthru
    _

</llo_original>
